<compile_context>
chip_gen: v7x
topology: tpu7x:2x2x1
jax: 0.10.0
libtpu: 0.0.40
codegen_flags: <defaults>
</compile_context>

<pallas_src>
import jax
import jax.numpy as jnp
from jax.experimental import pallas as pl
from jax.experimental.pallas import tpu as pltpu


_MAX_LANES = 2048          # widest lane width considered (multiple of 128)
_TILE_BYTES = 8 << 20      # ~8 MiB/block -> 32 MiB resident double-buffered in+out
_VMEM_LIMIT = 40 << 20     # explicit scoped-VMEM limit (fits v5e/v6e/v7x)
_BYPASS_BYTES = 4 << 20    # below this, skip the kernel entirely (identity module)


def _round_up(a: int, b: int) -> int:
    return ((a + b - 1) // b) * b


def _sublane_rows(dtype) -> int:
    """Dtype-aware sublane tile: f32 -> 8, bf16/f16 -> 16, int8/fp8 -> 32."""
    return {4: 8, 2: 16, 1: 32}.get(jnp.dtype(dtype).itemsize, 8)


def _pick_lanes(total: int, sublane: int):
    """Largest multiple of 128 (<= _MAX_LANES) dividing `total`.

    Prefers a width whose row count is sublane-aligned; returns None when no
    multiple of 128 divides `total` (caller then takes the identity bypass).
    """
    fallback = None
    for k in range(_MAX_LANES // 128, 0, -1):
        lanes = 128 * k
        if total % lanes != 0:
            continue
        if fallback is None:
            fallback = lanes
        if (total // lanes) % sublane == 0:
            return lanes
    return fallback


def _copy_kernel(x_ref, z_ref):
    # Identity "encode": one VMEM load + one lane-dense store per tile.
    z_ref[...] = x_ref[...]


def _identity_copy(x: jax.Array):
    """Tiled, pipelined Pallas copy of x. Returns None if x can't tile cleanly."""
    orig_shape = x.shape
    total = x.size
    itemsize = jnp.dtype(x.dtype).itemsize
    sublane = _sublane_rows(x.dtype)

    lanes = _pick_lanes(total, sublane)
    if lanes is None:
        return None  # element count not a multiple of 128 -> caller bypasses

    rows = total // lanes
    if rows <= sublane:
        # Tiny slab: single full-extent block (legal even if rows < 8).
        tile_r = rows
    else:
        cap = max(sublane, (_TILE_BYTES // (lanes * itemsize)) // sublane * sublane)
        if rows > cap:
            tile_r = cap
        else:
            # Fits in one block: split into >=2 row tiles so the parallel grid
            # axis can use both TensorCores on v7x.
            tile_r = min(_round_up(pl.cdiv(rows, 2), sublane),
                         _round_up(rows, sublane))

    grid = (pl.cdiv(rows, tile_r),)
    nbytes = total * itemsize

    x2d = x.reshape(rows, lanes)  # free: contiguous reshape, no pad
    z2d = pl.pallas_call(
        _copy_kernel,
        out_shape=jax.ShapeDtypeStruct((rows, lanes), x.dtype),
        grid=grid,
        in_specs=[pl.BlockSpec((tile_r, lanes), lambda i: (i, 0))],
        out_specs=pl.BlockSpec((tile_r, lanes), lambda i: (i, 0)),
        compiler_params=pltpu.CompilerParams(
            dimension_semantics=("parallel",),
            vmem_limit_bytes=_VMEM_LIMIT,
        ),
        cost_estimate=pl.CostEstimate(
            flops=0, transcendentals=0, bytes_accessed=2 * nbytes),
    )(x2d)

    return z2d.reshape(orig_shape)


def base_cae_forward(x: jax.Array, *, min_kernel_bytes: int = _BYPASS_BYTES):
    """BaseCAE forward. x is NCHW. Returns (out, z), both NCHW.

    out = decoder(z), z = encoder(x); both modules are parameter-free identity
    pass-throughs, so `out` and `z` are value-equal to `x`. `z` is materialized
    once via the Pallas copy kernel; `out` shares that buffer (no second HBM
    write stream). Inputs smaller than `min_kernel_bytes`, or whose element
    count is not a multiple of 128, bypass the kernel and return x directly
    (exact semantics, zero HBM traffic).
    """
    nbytes = x.size * jnp.dtype(x.dtype).itemsize
    if nbytes >= min_kernel_bytes:
        z = _identity_copy(x)          # z = encoder(x)
        if z is not None:
            out = z                    # out = decoder(z) (identity -> same buffer)
            return out, z
    # Bypass: identity module, return the input as-is.
    z = x
    out = z
    return out, z


if __name__ == "__main__":
    key = jax.random.PRNGKey(0)
    # Small NCHW input consistent with a conv-autoencoder: batch=2, C=4, 16x16.
    x = jax.random.normal(key, (2, 4, 16, 16), dtype=jnp.float32)

    # Force the Pallas path (this example is only 8 KiB, which would normally
    # take the size-gated bypass) so the kernel is actually exercised.
    out, z = base_cae_forward(x, min_kernel_bytes=0)
    jax.block_until_ready((out, z))
    assert out.shape == x.shape and z.shape == x.shape
    assert jnp.allclose(out, x) and jnp.allclose(z, x)

    # Slightly larger input to exercise a multi-block parallel grid.
    x2 = jax.random.normal(key, (2, 16, 32, 32), dtype=jnp.float32)
    out2, z2 = base_cae_forward(x2, min_kernel_bytes=0)
    jax.block_until_ready((out2, z2))
    assert jnp.allclose(out2, x2) and jnp.allclose(z2, x2)

    # Default (bypass) path must agree.
    out_b, z_b = base_cae_forward(x)
    jax.block_until_ready((out_b, z_b))
    assert jnp.allclose(out_b, x) and jnp.allclose(z_b, x)

    print("KERNEL_OK")
</pallas_src>

<mosaic_0001>
module attributes {stable_mosaic.version = 11 : i64} {
  func.func @_copy_kernel(%arg0: i32, %arg1: memref<8x256xf32, #tpu.memory_space<vmem>>, %arg2: memref<8x256xf32, #tpu.memory_space<vmem>>) attributes {dimension_semantics = [#tpu.dimension_semantics<parallel>], iteration_bounds = array<i64: 1>, scalar_prefetch = 0 : i64, scratch_operands = 0 : i64, tpu.core_type = #tpu.core_type<tc>, window_params = [{transform_indices = @transform_0, window_bounds = array<i64: 8, 256>}, {transform_indices = @transform_1, window_bounds = array<i64: 8, 256>}]} {
    %c0 = arith.constant 0 : index
    %c0_0 = arith.constant 0 : index
    %0 = vector.load %arg1[%c0, %c0_0] : memref<8x256xf32, #tpu.memory_space<vmem>>, vector<8x256xf32>
    %c0_1 = arith.constant 0 : index
    %c0_2 = arith.constant 0 : index
    %1 = vector.load %arg2[%c0_1, %c0_2] : memref<8x256xf32, #tpu.memory_space<vmem>>, vector<8x256xf32>
    tpu.vector_store %arg2[%c0_1, %c0_2], %0 {strides = array<i32>} : memref<8x256xf32, #tpu.memory_space<vmem>>, vector<8x256xf32>,
    return
  }
  func.func @transform_0(%arg0: i32) -> (i32, i32) {
    %c0_i32 = arith.constant 0 : i32
    %c0_i32_0 = arith.constant 0 : i32
    return %arg0, %c0_i32 : i32, i32
  }
  func.func @transform_1(%arg0: i32) -> (i32, i32) {
    %c0_i32 = arith.constant 0 : i32
    %c0_i32_0 = arith.constant 0 : i32
    return %arg0, %c0_i32 : i32, i32
  }
}

</mosaic_0001>

<llo_original>
// kernel: tpu_custom_call.1
$region0: #{tpu_custom_call.1}
  #allocation0 [shape = 'u32[]', space=smem, size = 0x4, offset = 0x4, fixed_abs, tag = 'smem constant byte address 0x4 - core index']
  #allocation1 [shape = 'u32[144,128]{1,0:T(1,128)}', space=vmem, size = 0x12000, scoped, tag = 'internal scratch']
  %s0 = inlined_call_operand.hbm [shape: f32[8,256], index: 0, kind: input, shape index: {}]
  %s1 = inlined_call_operand.hbm [shape: f32[8,256], index: 1, kind: output, shape index: {}]
  %s2 = sld [smem:[#allocation0]]
  $region18: #{tpu_custom_call.1} parent=0
    _
  %s4 = ssub.s32 1, %s2
  %s5 = scalar_select 0, %s4, %s2
  $region1: #{tpu_custom_call.1} parent=0
    #allocation2 [shape = 'u8[8192]{0}', space=vmem, size = 0x2000, scoped, tag = 'input window, operand 0, single buffered']
    #allocation3 [shape = 's32[1]{0}', space=sflag, size = 0x4, scoped, tag = 'scoped memory for tpu_custom_call.1']
    #allocation4 [shape = 's32[1]{0}', space=sflag, size = 0x4, scoped, tag = 'scoped memory for tpu_custom_call.1']
    #allocation5 [shape = 'u8[8192]{0}', space=vmem, size = 0x2000, scoped, tag = 'output window, operand 0, single buffered']
    %6 = vsyncpa [#allocation3], 0
    %7 = vsyncpa [#allocation4], 0
    // Predicated region
    $region2: #{tpu_custom_call.1} parent=1 // pred_check
      _
    $region3: #{tpu_custom_call.1} parent=1 // pred_check_branch
      %9 = sbr.rel (0) target = $region5
    $region4: #{tpu_custom_call.1} parent=1 // pred_region
      %s11 = ssub.s32 256, 256
      %12 = vsyncadd [#allocation3], %s11
      %s14 = sshll.u32 [#allocation2], 4
      %s15 = int_to_ptr.vmem [resolvable:$true] %s14
      %17 = dma.hbm_to_vmem [thread:$0]  %s0, 256, %s15, [#allocation3]
    $region5: #{tpu_custom_call.1} parent=1 // pred_fallthru
      _
    // Predicated region
    $region6: #{tpu_custom_call.1} parent=1 // pred_check
      _
    $region7: #{tpu_custom_call.1} parent=1 // pred_check_branch
      %19 = sbr.rel (0) target = $region9
    $region8: #{tpu_custom_call.1} parent=1 // pred_region
      %20 = dma.done [#allocation3], 256
    $region9: #{tpu_custom_call.1} parent=1 // pred_fallthru
      _
    %v21 = vld [vmem:[#allocation2] sm:$0xff]
    %v22 = vld [vmem:[#allocation2 + $0x8] sm:$0xff]
    %23 = vst [vmem:[#allocation5] sm:$0xff] %v21
    %24 = vst [vmem:[#allocation5 + $0x8] sm:$0xff] %v22
    // Predicated region
    $region10: #{tpu_custom_call.1} parent=1 // pred_check
      _
    $region11: #{tpu_custom_call.1} parent=1 // pred_check_branch
      %26 = sbr.rel (0) target = $region13
    $region12: #{tpu_custom_call.1} parent=1 // pred_region
      %s28 = ssub.s32 256, 256
      %29 = vsyncadd [#allocation4], %s28
      %s31 = sshll.u32 [#allocation5], 4
      %s32 = int_to_ptr.vmem [resolvable:$true] %s31
      %34 = dma.vmem_to_hbm [thread:$0]  %s32, 256, %s1, [#allocation4]
    $region13: #{tpu_custom_call.1} parent=1 // pred_fallthru
      _
    // Predicated region
    $region14: #{tpu_custom_call.1} parent=1 // pred_check
      _
    $region15: #{tpu_custom_call.1} parent=1 // pred_check_branch
      %36 = sbr.rel (0) target = $region17
    $region16: #{tpu_custom_call.1} parent=1 // pred_region
      %37 = dma.done [#allocation4], 256
    $region17: #{tpu_custom_call.1} parent=1 // pred_fallthru
      _
    %38 = vsyncpa [#allocation3], 1
    %39 = vsyncpa [#allocation4], 1

</llo_original>
